<compile_context>
chip_gen: v7x
topology: tpu7x:2x2x1
jax: 0.10.0
libtpu: 0.0.40
codegen_flags: <defaults>
</compile_context>

<pallas_src>
import functools

import jax
import jax.numpy as jnp
from jax.experimental import pallas as pl
from jax.experimental.pallas import tpu as pltpu


def _round_up(x, m):
    return (x + m - 1) // m * m


def _vmem_capacity_bytes():
    try:
        cap = getattr(pltpu.get_tpu_info(), "vmem_capacity_bytes", None)
        if cap:
            return int(cap)
    except Exception:
        pass
    return 64 * 1024 * 1024  # conservative (v7x) default


def _pick_tiling(n, d, vmem_budget):
    """Largest row tile tq (multiple of 8) whose working set fits the budget."""
    best = None
    for cand in (512, 256, 128, 64, 32, 16, 8):
        tq = min(cand, _round_up(n, 8))
        n_pad = _round_up(n, tq)
        keys = 2 * (d * 2 * n_pad * 2)        # resident bf16 keys (double-buffered)
        qp = 2 * 2 * (tq * d * 4)             # query + pair f32 blocks (double-buffered)
        slabs = 3 * (tq * 2 * n_pad * 4)      # logits / exp / temporaries
        best = (tq, n_pad)
        if keys + qp + slabs <= vmem_budget:
            return best
    return best


def _ntxent_kernel(q_ref, p_ref, keys_ref, out_ref, *, inv_t, pad_cols):
    """One grid step: NT-Xent per-row losses for a (tq,) block of query rows.

    grid = (2, half); program_id(0) selects which half the queries come from,
    program_id(1) the row block.  The BlockSpecs already deliver:
      q_ref    : (tq, D)        f32 unit-norm query rows
      p_ref    : (tq, D)        f32 unit-norm positive-pair rows
      keys_ref : (D, 2*n_pad)   bf16 pre-transposed keys (resident, grid-invariant)
      out_ref  : (tq, 1)        per-row loss block
    """
    inv_t = jnp.float32(inv_t)
    q = q_ref[...]                                                        # (tq, D) f32
    p = p_ref[...]                                                        # (tq, D) f32

    # Numerator logit in f32 (matches the reference numerator precision).
    pair_logit = jnp.sum(q * p, axis=1, keepdims=True) * inv_t            # (tq, 1)

    # Single canonical (tq, D) @ (D, 2*n_pad) MXU matmul, bf16 operands, f32 acc.
    q_bf = q.astype(jnp.bfloat16)
    logits = jnp.dot(q_bf, keys_ref[...],
                     preferred_element_type=jnp.float32) * inv_t          # (tq, 2*n_pad)

    # Self (diagonal) term from the same bf16-rounded query -> consistent with
    # the matmul's own diagonal contribution (no residual bias when subtracting).
    q_bf32 = q_bf.astype(jnp.float32)
    self_logit = jnp.sum(q_bf32 * q_bf32, axis=1, keepdims=True) * inv_t  # (tq, 1)

    denom = jnp.sum(jnp.exp(logits), axis=1, keepdims=True) - jnp.exp(self_logit)
    if pad_cols:  # padded key rows are zero vectors -> logit 0 -> exp(0) = 1 each
        denom = denom - jnp.float32(pad_cols)

    # l(i, pair(i)) = -log(exp(pair)/denom) = log(denom) - pair_logit
    out_ref[...] = jnp.log(denom) - pair_logit


def contrastive_loss(emb_i, emb_j, temperature=0.5):
    """NT-Xent loss matching ContrastiveLoss.forward(emb_i, emb_j, batch_size)."""
    n, d = emb_i.shape

    # --- hoisted, once-per-call L2 normalization (F.normalize(dim=1)) ---
    def normalize(x):
        x = x.astype(jnp.float32)
        ssq = jnp.sum(x * x, axis=1, keepdims=True)
        # clamp ||x|| at 1e-12  <=>  clamp ||x||^2 at 1e-24; rsqrt + multiply (EUP)
        return x * jax.lax.rsqrt(jnp.maximum(ssq, jnp.float32(1e-24)))

    z_i = normalize(emb_i)
    z_j = normalize(emb_j)

    # Per-generation VMEM budget (v5e/v6e: 128 MiB physical, v7x: 64 MiB).
    vmem_cap = _vmem_capacity_bytes()
    vmem_limit = min(int(vmem_cap * 3 // 4), 100 * 1024 * 1024)
    tq, n_pad = _pick_tiling(n, d, int(vmem_limit * 0.8))
    half = n_pad // tq
    pad = n_pad - n

    if pad:
        z_i = jnp.pad(z_i, ((0, pad), (0, 0)))
        z_j = jnp.pad(z_j, ((0, pad), (0, 0)))

    reps = jnp.concatenate([z_i, z_j], axis=0)        # (2*n_pad, d) f32, unit rows
    keys_t = reps.T.astype(jnp.bfloat16)              # (d, 2*n_pad) pre-transposed keys

    kernel = functools.partial(_ntxent_kernel,
                               inv_t=float(1.0 / float(temperature)),
                               pad_cols=2 * pad)

    per_row = pl.pallas_call(
        kernel,
        out_shape=jax.ShapeDtypeStruct((2 * n_pad, 1), jnp.float32),
        grid=(2, half),
        in_specs=[
            # query rows for this (half, block)
            pl.BlockSpec((tq, d), lambda h, b: (h * half + b, 0)),
            # their positive-pair rows (the opposite half, same block index)
            pl.BlockSpec((tq, d), lambda h, b: ((1 - h) * half + b, 0)),
            # resident, grid-invariant transposed bf16 keys
            pl.BlockSpec((d, 2 * n_pad), lambda h, b: (0, 0)),
        ],
        out_specs=pl.BlockSpec((tq, 1), lambda h, b: (h * half + b, 0)),
        compiler_params=pltpu.CompilerParams(
            dimension_semantics=("parallel", "parallel"),
            vmem_limit_bytes=vmem_limit,
        ),
    )(reps, reps, keys_t)

    per_row = per_row[:, 0]
    # Padded query rows carry meaningless values; exclude them explicitly.
    loss = jnp.sum(per_row[:n]) + jnp.sum(per_row[n_pad:n_pad + n])
    return loss / (2 * n)


def _reference_loss(emb_i, emb_j, temperature=0.5):
    # Pure-JAX reference mirroring the PyTorch module exactly.
    def normalize(x):
        nrm = jnp.sqrt(jnp.sum(x * x, axis=1, keepdims=True))
        return x / jnp.maximum(nrm, 1e-12)

    n = emb_i.shape[0]
    reps = jnp.concatenate([normalize(emb_i), normalize(emb_j)], axis=0)
    nrm = jnp.sqrt(jnp.sum(reps * reps, axis=1, keepdims=True))
    sim = (reps @ reps.T) / jnp.maximum(nrm * nrm.T, 1e-8)
    exp_l = jnp.exp(sim / temperature)

    two_n = 2 * n
    mask = 1.0 - jnp.eye(two_n, dtype=jnp.float32)
    denom = jnp.sum(exp_l * mask, axis=1)
    pair_idx = jnp.concatenate([jnp.arange(n) + n, jnp.arange(n)])
    num = exp_l[jnp.arange(two_n), pair_idx]
    return jnp.mean(-jnp.log(num / denom))


if __name__ == "__main__":
    # Module __init__: only a scalar temperature buffer (0.5); no learned weights.
    # `verbose` printing path is intentionally not reproduced.
    key = jax.random.PRNGKey(0)

    for (batch, dim) in ((4, 32), (24, 64)):   # exercises padded and unpadded paths
        key, k1, k2 = jax.random.split(key, 3)
        emb_i = jax.random.normal(k1, (batch, dim), dtype=jnp.float32)
        emb_j = jax.random.normal(k2, (batch, dim), dtype=jnp.float32)

        loss = contrastive_loss(emb_i, emb_j, temperature=0.5)
        jax.block_until_ready(loss)

        ref = _reference_loss(emb_i, emb_j, temperature=0.5)
        # bf16 MXU operands feed the denominator logits -> relaxed tolerance.
        assert jnp.allclose(loss, ref, rtol=2e-2, atol=2e-3), (batch, dim, loss, ref)

    print("KERNEL_OK")
</pallas_src>

<mosaic_0001>
module attributes {stable_mosaic.version = 11 : i64} {
  func.func @_ntxent_kernel(%arg0: i32, %arg1: i32, %arg2: memref<8x32xf32, #tpu.memory_space<vmem>>, %arg3: memref<8x32xf32, #tpu.memory_space<vmem>>, %arg4: memref<32x16xbf16, #tpu.memory_space<vmem>>, %arg5: memref<8x1xf32, #tpu.memory_space<vmem>>) attributes {dimension_semantics = [#tpu.dimension_semantics<parallel>, #tpu.dimension_semantics<parallel>], iteration_bounds = array<i64: 2, 1>, scalar_prefetch = 0 : i64, scratch_operands = 0 : i64, tpu.core_type = #tpu.core_type<tc>, window_params = [{transform_indices = @transform_0, window_bounds = array<i64: 8, 32>}, {transform_indices = @transform_1, window_bounds = array<i64: 8, 32>}, {pipeline_mode = #tpu.pipeline_mode<synchronous>, transform_indices = @transform_2, window_bounds = array<i64: 32, 16>}, {transform_indices = @transform_3, window_bounds = array<i64: 8, 1>}]} {
    %c0 = arith.constant 0 : index
    %c0_0 = arith.constant 0 : index
    %0 = vector.load %arg2[%c0, %c0_0] : memref<8x32xf32, #tpu.memory_space<vmem>>, vector<8x32xf32>
    %c0_1 = arith.constant 0 : index
    %c0_2 = arith.constant 0 : index
    %1 = vector.load %arg3[%c0_1, %c0_2] : memref<8x32xf32, #tpu.memory_space<vmem>>, vector<8x32xf32>
    %2 = arith.mulf %0, %1 : vector<8x32xf32>
    %cst = arith.constant dense<0.000000e+00> : vector<8xf32>
    %3 = vector.multi_reduction <add>, %2, %cst [1] : vector<8x32xf32> to vector<8xf32>
    %4 = vector.shape_cast %3 : vector<8xf32> to vector<8x1xf32>
    %cst_3 = arith.constant 2.000000e+00 : f32
    %5 = vector.broadcast %cst_3 : f32 to vector<8x1xf32>
    %6 = arith.mulf %4, %5 : vector<8x1xf32>
    %7 = arith.truncf %0 : vector<8x32xf32> to vector<8x32xbf16>
    %c0_4 = arith.constant 0 : index
    %c0_5 = arith.constant 0 : index
    %8 = vector.load %arg4[%c0_4, %c0_5] : memref<32x16xbf16, #tpu.memory_space<vmem>>, vector<32x16xbf16>
    %cst_6 = arith.constant dense<0.000000e+00> : vector<8x16xf32>
    %9 = tpu.matmul %7, %8, %cst_6 {dimension_numbers = #tpu.dot_dimension_numbers<[1], [0], [0], [1], [0, 0, 1, 1], [], []>} : vector<8x32xbf16>, vector<32x16xbf16>, vector<8x16xf32> -> vector<8x16xf32>
    %cst_7 = arith.constant 2.000000e+00 : f32
    %10 = vector.broadcast %cst_7 : f32 to vector<8x16xf32>
    %11 = arith.mulf %9, %10 : vector<8x16xf32>
    %12 = arith.extf %7 : vector<8x32xbf16> to vector<8x32xf32>
    %13 = arith.mulf %12, %12 : vector<8x32xf32>
    %cst_8 = arith.constant dense<0.000000e+00> : vector<8xf32>
    %14 = vector.multi_reduction <add>, %13, %cst_8 [1] : vector<8x32xf32> to vector<8xf32>
    %15 = vector.shape_cast %14 : vector<8xf32> to vector<8x1xf32>
    %cst_9 = arith.constant 2.000000e+00 : f32
    %16 = vector.broadcast %cst_9 : f32 to vector<8x1xf32>
    %17 = arith.mulf %15, %16 : vector<8x1xf32>
    %18 = math.exp %11 : vector<8x16xf32>
    %cst_10 = arith.constant dense<0.000000e+00> : vector<8xf32>
    %19 = vector.multi_reduction <add>, %18, %cst_10 [1] : vector<8x16xf32> to vector<8xf32>
    %20 = vector.shape_cast %19 : vector<8xf32> to vector<8x1xf32>
    %21 = math.exp %17 : vector<8x1xf32>
    %22 = arith.subf %20, %21 : vector<8x1xf32>
    %cst_11 = arith.constant 8.000000e+00 : f32
    %23 = vector.broadcast %cst_11 : f32 to vector<8x1xf32>
    %24 = arith.subf %22, %23 : vector<8x1xf32>
    %25 = math.log %24 : vector<8x1xf32>
    %26 = arith.subf %25, %6 : vector<8x1xf32>
    %c0_12 = arith.constant 0 : index
    %c0_13 = arith.constant 0 : index
    %27 = vector.load %arg5[%c0_12, %c0_13] : memref<8x1xf32, #tpu.memory_space<vmem>>, vector<8x1xf32>
    tpu.vector_store %arg5[%c0_12, %c0_13], %26 {strides = array<i32>} : memref<8x1xf32, #tpu.memory_space<vmem>>, vector<8x1xf32>,
    return
  }
  func.func @transform_0(%arg0: i32, %arg1: i32) -> (i32, i32) {
    %c1_i32 = arith.constant 1 : i32
    %0 = arith.muli %arg0, %c1_i32 : i32
    %1 = arith.addi %0, %arg1 : i32
    %c0_i32 = arith.constant 0 : i32
    %c0_i32_0 = arith.constant 0 : i32
    return %1, %c0_i32 : i32, i32
  }
  func.func @transform_1(%arg0: i32, %arg1: i32) -> (i32, i32) {
    %c1_i32 = arith.constant 1 : i32
    %0 = arith.subi %c1_i32, %arg0 : i32
    %c1_i32_0 = arith.constant 1 : i32
    %1 = arith.muli %0, %c1_i32_0 : i32
    %2 = arith.addi %1, %arg1 : i32
    %c0_i32 = arith.constant 0 : i32
    %c0_i32_1 = arith.constant 0 : i32
    return %2, %c0_i32 : i32, i32
  }
  func.func @transform_2(%arg0: i32, %arg1: i32) -> (i32, i32) {
    %c0_i32 = arith.constant 0 : i32
    %c0_i32_0 = arith.constant 0 : i32
    %c0_i32_1 = arith.constant 0 : i32
    return %c0_i32, %c0_i32_0 : i32, i32
  }
  func.func @transform_3(%arg0: i32, %arg1: i32) -> (i32, i32) {
    %c1_i32 = arith.constant 1 : i32
    %0 = arith.muli %arg0, %c1_i32 : i32
    %1 = arith.addi %0, %arg1 : i32
    %c0_i32 = arith.constant 0 : i32
    %c0_i32_0 = arith.constant 0 : i32
    return %1, %c0_i32 : i32, i32
  }
}

</mosaic_0001>

<llo_original>
// kernel: tpu_custom_call.1
$region0: #{tpu_custom_call.1}
  #allocation0 [shape = 'u32[]', space=smem, size = 0x4, offset = 0x4, fixed_abs, tag = 'smem constant byte address 0x4 - core index']
  #allocation1 [shape = 'u32[144,128]{1,0:T(1,128)}', space=vmem, size = 0x12000, scoped, tag = 'internal scratch']
  %s0 = inlined_call_operand.vmem [shape: f32[16,32], index: 0, kind: input, shape index: {}]
  %s1 = inlined_call_operand.hbm [shape: f32[16,32], index: 1, kind: input, shape index: {}]
  %s2 = inlined_call_operand.vmem [shape: bf16[32,16], index: 2, kind: input, shape index: {}]
  %s3 = inlined_call_operand.vmem [shape: f32[16,1], index: 3, kind: output, shape index: {}]
  %s4 = sld [smem:[#allocation0]]
  $region49: #{tpu_custom_call.1} parent=0
    _
  %s6 = ssub.s32 1, %s4
  %s7 = scalar_select 0, %s6, %s4
  $region1: #{tpu_custom_call.1} parent=0
    #allocation2 [shape = 'u8[8192]{0}', space=vmem, size = 0x2000, scoped, tag = 'input window, operand 1']
    #allocation3 [shape = 's32[2]{0}', space=sflag, size = 0x8, scoped, tag = 'scoped memory for tpu_custom_call.1']
    %8 = vsyncpa [#allocation3], 0
    %s9 = scalar_lea.sflag [#allocation3], 1
    %10 = vsyncpa %s9, 0
    loop: start=0, step=1, limit=4
    $region2: #{tpu_custom_call.1} parent=1 // loop_pre_header
      _
    $region3: #{tpu_custom_call.1} parent=1 // loop_header
      %s12 = sphi 0, %s16
      %p13 = scmp.ge.s32.totalorder %s12, 4
      %s19 = sphi 0, %s31
      %s20 = sphi 0, %s27
      %s21 = sphi 0, %s19
      %s22 = sphi 0, %s20
      %s23 = sphi 0, %s21
      %s24 = sphi 0, %s22
      %s36 = sphi 0, %s38
      %s39 = sphi 0, %s36
      %s40 = sphi 0, %s39
      %s56 = sphi 0, %s40
      %s66 = sphi 0, %s68
      %s69 = sphi 0, %s66
      %s70 = sphi 0, %s69
      %s86 = sphi 0, %s70
      %s90 = sphi 0, %s90
      %s92 = sphi 0, %s90
      %s93 = sphi 0, %s92
      %s107 = sphi 0, %s93
      %s115 = sphi 0, %s117
      %s118 = sphi 0, %s115
      %s119 = sphi 0, %s118
      %s135 = sphi 0, %s119
    $region4: #{tpu_custom_call.1} parent=1 // loop_header_branch
      %15 = sbr.rel (%p13) target = $region8
    $region5: #{tpu_custom_call.1} parent=1 // loop_body
      %s17 = ssub.s32 %s12, 1
      %s18 = ssub.s32 %s12, 2
      %s25 = sadd.s32 1, %s20
      %p26 = scmp.ge.s32.totalorder %s25, 1
      %s27 = scalar_select %p26, 0, %s25
      %s28 = sadd.s32 1, %s19
      %s29 = scalar_select %p26, %s28, %s19
      %p30 = scmp.ge.s32.totalorder %s29, 2
      %s31 = scalar_select %p30, 0, %s29
      %s32 = sadd.s32 %s19, %s20
      %s33 = sadd.s32 %s31, %s27
      %s34 = ssub.s32 %s32, %s33
      %p35 = scmp.eq.s32.totalorder %s34, 0
      %s37 = sadd.s32 %s36, 1
      %s38 = scalar_select %p35, %s36, %s37
      %p41 = pneg %p35
      %p42 = scmp.eq.s32.totalorder %s12, 1
      %p43 = por %p41, %p42
      %p44 = scmp.ne.s32.totalorder %s36, %s39
      %p45 = scmp.eq.s32.totalorder %s12, 0
      %p46 = por %p44, %p45
      %p47 = scmp.ne.s32.totalorder %s36, %s39
      %p48 = scmp.eq.s32.totalorder %s17, 1
      %p49 = por %p47, %p48
      %p50 = scmp.ne.s32.totalorder %s39, %s40
      %p51 = scmp.eq.s32.totalorder %s17, 0
      %p52 = por %p50, %p51
      %p53 = scmp.ne.s32.totalorder %s39, %s40
      %p54 = scmp.eq.s32.totalorder %s18, 1
      %p55 = por %p53, %p54
      %p57 = scmp.ne.s32.totalorder %s40, %s56
      %p58 = scmp.eq.s32.totalorder %s18, 0
      %p59 = por %p57, %p58
      %s60 = ssub.s32 1, %s19
      %s61 = sadd.s32 %s60, %s20
      %s62 = ssub.s32 1, %s31
      %s63 = sadd.s32 %s62, %s27
      %s64 = ssub.s32 %s61, %s63
      %p65 = scmp.eq.s32.totalorder %s64, 0
      %s67 = sadd.s32 %s66, 1
      %s68 = scalar_select %p65, %s66, %s67
      %p71 = pneg %p65
      %p72 = scmp.eq.s32.totalorder %s12, 1
      %p73 = por %p71, %p72
      %p74 = scmp.ne.s32.totalorder %s66, %s69
      %p75 = scmp.eq.s32.totalorder %s12, 0
      %p76 = por %p74, %p75
      %p77 = scmp.ne.s32.totalorder %s66, %s69
      %p78 = scmp.eq.s32.totalorder %s17, 1
      %p79 = por %p77, %p78
      %p80 = scmp.ne.s32.totalorder %s69, %s70
      %p81 = scmp.eq.s32.totalorder %s17, 0
      %p82 = por %p80, %p81
      %p83 = scmp.ne.s32.totalorder %s69, %s70
      %p84 = scmp.eq.s32.totalorder %s18, 1
      %p85 = por %p83, %p84
      %p87 = scmp.ne.s32.totalorder %s70, %s86
      %p88 = scmp.eq.s32.totalorder %s18, 0
      %p89 = por %p87, %p88
      %s91 = sadd.s32 %s90, 1
      %p94 = scmp.eq.s32.totalorder %s12, 1
      %p95 = scmp.ne.s32.totalorder %s90, %s92
      %p96 = scmp.eq.s32.totalorder %s12, 0
      %p97 = por %p95, %p96
      %p98 = scmp.ne.s32.totalorder %s90, %s92
      %p99 = scmp.eq.s32.totalorder %s17, 1
      %p100 = por %p98, %p99
      %p101 = scmp.ne.s32.totalorder %s92, %s93
      %p102 = scmp.eq.s32.totalorder %s17, 0
      %p103 = por %p101, %p102
      %p104 = scmp.ne.s32.totalorder %s92, %s93
      %p105 = scmp.eq.s32.totalorder %s18, 1
      %p106 = por %p104, %p105
      %p108 = scmp.ne.s32.totalorder %s93, %s107
      %p109 = scmp.eq.s32.totalorder %s18, 0
      %p110 = por %p108, %p109
      %s111 = sadd.s32 %s19, %s20
      %s112 = sadd.s32 %s31, %s27
      %s113 = ssub.s32 %s111, %s112
      %p114 = scmp.eq.s32.totalorder %s113, 0
      %s116 = sadd.s32 %s115, 1
      %s117 = scalar_select %p114, %s115, %s116
      %p120 = pneg %p114
      %p121 = scmp.eq.s32.totalorder %s12, 1
      %p122 = por %p120, %p121
      %p123 = scmp.ne.s32.totalorder %s115, %s118
      %p124 = scmp.eq.s32.totalorder %s12, 0
      %p125 = por %p123, %p124
      %p126 = scmp.ne.s32.totalorder %s115, %s118
      %p127 = scmp.eq.s32.totalorder %s17, 1
      %p128 = por %p126, %p127
      %p129 = scmp.ne.s32.totalorder %s118, %s119
      %p130 = scmp.eq.s32.totalorder %s17, 0
      %p131 = por %p129, %p130
      %p132 = scmp.ne.s32.totalorder %s118, %s119
      %p133 = scmp.eq.s32.totalorder %s18, 1
      %p134 = por %p132, %p133
      %p136 = scmp.ne.s32.totalorder %s119, %s135
      %p137 = scmp.eq.s32.totalorder %s18, 0
      %p138 = por %p136, %p137
      %p139 = scmp.le.s32.totalorder 1, %s12
      %p140 = scmp.lt.s32.totalorder %s12, 3
      %p141 = pnand %p139, %p140
      %p142 = pneg %p141
      // Predicated region
      $region9: #{tpu_custom_call.1} parent=5 // pred_check
        _
      $region10: #{tpu_custom_call.1} parent=5 // pred_check_branch
        %144 = sbr.rel (%p141) target = $region12
      $region11: #{tpu_custom_call.1} parent=5 // pred_region
        %s145 = ssub.s32 %s12, 1
        // Predicated region
        $region13: #{tpu_custom_call.1} parent=11 // pred_check
          %p146 = pneg %p103
        $region14: #{tpu_custom_call.1} parent=11 // pred_check_branch
          %148 = sbr.rel (%p146) target = $region16
        $region15: #{tpu_custom_call.1} parent=11 // pred_region
          _
        $region16: #{tpu_custom_call.1} parent=11 // pred_fallthru
          _
      $region12: #{tpu_custom_call.1} parent=5 // pred_fallthru
        _
      %p149 = scmp.lt.s32.totalorder %s12, 2
      // Predicated region
      $region17: #{tpu_custom_call.1} parent=5 // pred_check
        %p150 = pneg %p149
      $region18: #{tpu_custom_call.1} parent=5 // pred_check_branch
        %152 = sbr.rel (%p150) target = $region20
      $region19: #{tpu_custom_call.1} parent=5 // pred_region
        // Predicated region
        $region21: #{tpu_custom_call.1} parent=19 // pred_check
          %p153 = pneg %p46
        $region22: #{tpu_custom_call.1} parent=19 // pred_check_branch
          %155 = sbr.rel (%p153) target = $region24
        $region23: #{tpu_custom_call.1} parent=19 // pred_region
          %s156 = sadd.s32 %s19, %s20
          %p157 = scmp.lt.s32.totalorder %s156, 1
          %s158 = scalar_select %p157, %s156, 1
          %s159 = smul.addr %s158, 8
          %s160 = scalar_lea.vmem %s0, %s159
          %s161 = sadd.s32 %s19, %s20
        $region24: #{tpu_custom_call.1} parent=19 // pred_fallthru
          _
        // Predicated region
        $region25: #{tpu_custom_call.1} parent=19 // pred_check
          %p162 = pneg %p76
        $region26: #{tpu_custom_call.1} parent=19 // pred_check_branch
          %164 = sbr.rel (%p162) target = $region28
        $region27: #{tpu_custom_call.1} parent=19 // pred_region
          %s165 = sand.u32 %s66, 1
          %s166 = scalar_lea.sflag [#allocation3], %s165
          %s167 = sand.u32 %s66, 1
          %s168 = smul.addr %s167, 8
          %s169 = scalar_lea.vmem [#allocation2], %s168
          %s170 = ssub.s32 1, %s19
          %s171 = sadd.s32 %s170, %s20
          %s173 = ssub.s32 128, 128
          %174 = vsyncadd %s166, %s173
          %s175 = smul.addr %s171, 128
          %s176 = scalar_lea.hbm %s1, %s175
          %s178 = sshll.u32 %s169, 4
          %s179 = int_to_ptr.vmem [resolvable:$true] %s178
          %181 = dma.hbm_to_vmem [thread:$0]  %s176, 128, %s179, %s166
        $region28: #{tpu_custom_call.1} parent=19 // pred_fallthru
          _
      $region20: #{tpu_custom_call.1} parent=5 // pred_fallthru
        _
      %p182 = scmp.le.s32.totalorder 1, %s12
      %p183 = scmp.lt.s32.totalorder %s12, 3
      %p184 = pnand %p182, %p183
      %p185 = pneg %p184
      // Predicated region
      $region29: #{tpu_custom_call.1} parent=5 // pred_check
        _
      $region30: #{tpu_custom_call.1} parent=5 // pred_check_branch
        %187 = sbr.rel (%p184) target = $region32
      $region31: #{tpu_custom_call.1} parent=5 // pred_region
        %s188 = ssub.s32 %s12, 1
        %s189 = sand.u32 %s69, 1
        %s190 = scalar_lea.sflag [#allocation3], %s189
        %s191 = sand.u32 %s69, 1
        %s192 = smul.addr %s191, 8
        %s193 = scalar_lea.vmem [#allocation2], %s192
        // Predicated region
        $region33: #{tpu_custom_call.1} parent=31 // pred_check
          %p194 = pneg %p82
        $region34: #{tpu_custom_call.1} parent=31 // pred_check_branch
          %196 = sbr.rel (%p194) target = $region36
        $region35: #{tpu_custom_call.1} parent=31 // pred_region
          %197 = dma.done %s190, 128
        $region36: #{tpu_custom_call.1} parent=31 // pred_fallthru
          _
        %s198 = sadd.s32 %s21, %s22
        %p199 = scmp.lt.s32.totalorder %s198, 1
        %s200 = scalar_select %p199, %s198, 1
        %s201 = smul.addr %s200, 8
        %s202 = scalar_lea.vmem %s0, %s201
        %p203 = pneg %p52
        %p204 = pneg %p49
        %s205 = sand.u32 %s69, 1
        %s206 = scalar_lea.sflag [#allocation3], %s205
        %s207 = sand.u32 %s69, 1
        %s208 = smul.addr %s207, 8
        %s209 = scalar_lea.vmem [#allocation2], %s208
        %p210 = pneg %p82
        %p211 = pneg %p79
        %p212 = pneg %p103
        %p213 = pneg %p100
        %p214 = pneg %p131
        %p215 = pneg %p128
        %s216 = sadd.s32 %s21, %s22
        %p217 = scmp.lt.s32.totalorder %s216, 1
        %s218 = scalar_select %p217, %s216, 1
        %s219 = smul.addr %s218, 8
        %s220 = scalar_lea.vmem %s3, %s219
        %s221 = sadd.s32 %s21, %s22
        %p222 = scmp.lt.s32.totalorder %s221, 1
        %s223 = scalar_select %p222, %s221, 1
        %s224 = smul.addr %s223, 8
        %s225 = scalar_lea.vmem %s0, %s224
        %s226 = sadd.s32 %s21, %s22
        %s227 = ssub.s32 1, %s21
        %s228 = sadd.s32 %s227, %s22
        %s229 = sadd.s32 %s21, %s22
        %p230 = scmp.lt.s32.totalorder %s229, 1
        %s231 = scalar_select %p230, %s229, 1
        %s232 = smul.addr %s231, 8
        %s233 = scalar_lea.vmem %s3, %s232
        %s234 = sadd.s32 %s21, %s22
        %v236 = vld [vmem:[%s225] sm:$0xff]
        %v237 = vld [vmem:[%s193] sm:$0xff]
        %v238 = vmul.f32 %v236, %v237
        %vm239 = vcmask 261120
        %v240 = vsel %vm239, %v238, 0.0
        %241 = vadd.xlane.f32.xlu0 %v240
        %v242 = vpop.xlane.xlu0 %241
        %v243 = vmul.f32 %v242, 2.0
        %v244 = vpack.c.bf16 %v236, %v236
        %v245 = vld [vmem:[%s2] sm:$0xf]
        %v246 = vld [vmem:[%s2 + $0x4] sm:$0xf]
        %v247 = vld [vmem:[%s2 + $0x8] sm:$0xf]
        %v248 = vld [vmem:[%s2 + $0xc] sm:$0xf]
        %v253 = vunpack.c.l.b16 %v245
        %v254 = vunpack.c.l.b16 %v246
        %v255 = vunpack.c.l.b16 %v247
        %v256 = vunpack.c.l.b16 %v248
        %v257 = vpack.c.b16 %v254, %v253
        %v258 = vpack.c.b16 %v256, %v255
        %v262 = vsel %vm239, %v244, 0
        %264 = vmatprep.subr.bf16.mxu0 0
        %265 = vmatpush1.bf16.msra.mxu0 %v257
        %266 = vmatprep.subr.bf16.mxu0 0
        %267 = vmatpush1.bf16.msra.mxu0 %v258
        %268 = vmatprep.subr.bf16.mxu0 0
        %269 = vmatpush1.bf16.msra.mxu0 0
        %270 = vmatprep.subr.bf16.mxu0 0
        %271 = vmatpush1.bf16.msra.mxu0 0
        %272 = vmatprep.subr.bf16.mxu0 0
        %273 = vmatpush1.bf16.msra.mxu0 0
        %274 = vmatprep.subr.bf16.mxu0 0
        %275 = vmatpush1.bf16.msra.mxu0 0
        %276 = vmatprep.subr.bf16.mxu0 0
        %277 = vmatpush1.bf16.msra.mxu0 0
        %278 = vmatprep.subr.bf16.mxu0 0
        %279 = vmatpush1.bf16.msra.mxu0 0
        %280 = vmatprep.subr.bf16.mxu0 0
        %281 = vmatpush1.bf16.msra.mxu0 0
        %282 = vmatprep.subr.bf16.mxu0 0
        %283 = vmatpush1.bf16.msra.mxu0 0
        %284 = vmatprep.subr.bf16.mxu0 0
        %285 = vmatpush1.bf16.msra.mxu0 0
        %286 = vmatprep.subr.bf16.mxu0 0
        %287 = vmatpush1.bf16.msra.mxu0 0
        %288 = vmatprep.subr.bf16.mxu0 0
        %289 = vmatpush1.bf16.msra.mxu0 0
        %290 = vmatprep.subr.bf16.mxu0 0
        %291 = vmatpush1.bf16.msra.mxu0 0
        %292 = vmatprep.subr.bf16.mxu0 0
        %293 = vmatpush1.bf16.msra.mxu0 0
        %294 = vmatprep.subr.bf16.mxu0 0
        %295 = vmatpush1.bf16.msra.mxu0 0
        %296 = vmatprep.mubr.bf16.mxu0 0
        %297 = vmatmul.mubr.bf16.gmra.mrb[0].mxu0 %v262
        %v298 = vpop.f32.mrb[0].mxu0
        %v299 = vadd.f32 0.0, %v298
        %v300 = vpop.f32.mrb[0].mxu0
        %v301 = vpop.f32.mrb[0].mxu0
        %v302 = vpop.f32.mrb[0].mxu0
        %303 = vdwg.mxu0
        %v304 = vmul.f32 %v299, 2.0
        %v305 = vunpack.c.l.bf16 %v244
        %v306 = vmul.f32 %v305, %v305
        %v307 = vsel %vm239, %v306, 0.0
        %308 = vadd.xlane.f32.xlu0 %v307
        %v309 = vpop.xlane.xlu0 %308
        %v310 = vmul.f32 %v309, 2.0
        %v311 = vmul.f32 %v304, 1.442695
        %v312 = vpow.pop %v311
        %vm313 = vcmask 130048
        %v314 = vsel %vm313, %v312, 0.0
        %315 = vadd.xlane.f32.xlu0 %v314
        %v316 = vpop.xlane.xlu0 %315
        %v317 = vmul.f32 %v310, 1.442695
        %v318 = vpow.pop %v317
        %v319 = vsub.f32 %v316, %v318
        %v320 = vsub.f32 %v319, 8.0
        %v321 = vlog2.pop %v320
        %v322 = vmul.f32 %v321, 0.6931472
        %v323 = vsub.f32 %v322, %v243
        %vm324 = vcmask 7168
        %325 = vst.msk [vmem:[%s233] sm:$0xff] %vm324, %v323
        %s326 = sadd.s32 %s21, %s22
        %p327 = scmp.lt.s32.totalorder %s326, 1
        %s328 = scalar_select %p327, %s326, 1
        %s329 = smul.addr %s328, 8
        %s330 = scalar_lea.vmem %s3, %s329
        // Predicated region
        $region37: #{tpu_custom_call.1} parent=31 // pred_check
          %p331 = pneg %p128
        $region38: #{tpu_custom_call.1} parent=31 // pred_check_branch
          %333 = sbr.rel (%p331) target = $region40
        $region39: #{tpu_custom_call.1} parent=31 // pred_region
          %s334 = sadd.s32 %s21, %s22
        $region40: #{tpu_custom_call.1} parent=31 // pred_fallthru
          _
      $region32: #{tpu_custom_call.1} parent=5 // pred_fallthru
        _
      %p335 = scmp.le.s32.totalorder 2, %s12
      // Predicated region
      $region41: #{tpu_custom_call.1} parent=5 // pred_check
        %p336 = pneg %p335
      $region42: #{tpu_custom_call.1} parent=5 // pred_check_branch
        %338 = sbr.rel (%p336) target = $region44
      $region43: #{tpu_custom_call.1} parent=5 // pred_region
        %s339 = ssub.s32 %s12, 2
        // Predicated region
        $region45: #{tpu_custom_call.1} parent=43 // pred_check
          %p340 = pneg %p134
        $region46: #{tpu_custom_call.1} parent=43 // pred_check_branch
          %342 = sbr.rel (%p340) target = $region48
        $region47: #{tpu_custom_call.1} parent=43 // pred_region
          %s343 = sadd.s32 %s23, %s24
          %p344 = scmp.lt.s32.totalorder %s343, 1
          %s345 = scalar_select %p344, %s343, 1
          %s346 = smul.addr %s345, 8
          %s347 = scalar_lea.vmem %s3, %s346
        $region48: #{tpu_custom_call.1} parent=43 // pred_fallthru
          _
      $region44: #{tpu_custom_call.1} parent=5 // pred_fallthru
        _
    $region6: #{tpu_custom_call.1} parent=1 // loop_footer
      %s16 = sadd.s32 1, %s12
    $region7: #{tpu_custom_call.1} parent=1 // loop_footer_branch
      %11 = sbr.rel target = $region3
    $region8: #{tpu_custom_call.1} parent=1 // loop_exit
      _
    %348 = vsyncpa [#allocation3], 1
    %s349 = scalar_lea.sflag [#allocation3], 1
    %350 = vsyncpa %s349, 1

</llo_original>
